<compile_context>
chip_gen: v7x
topology: tpu7x:2x2x1
jax: 0.10.0
libtpu: 0.0.40
codegen_flags: <defaults>
</compile_context>

<pallas_src>
import functools

import jax
import jax.numpy as jnp
from jax.experimental import pallas as pl
from jax.experimental.pallas import tpu as pltpu


def _adain_kernel(x_ref, w_ref, b_ref, o_ref, *, inv_n, eps):
    # x_ref: (TILE_BC, HW) in native dtype; w_ref, b_ref: (TILE_BC, 1) f32;
    # o_ref: (TILE_BC, HW) in x.dtype.
    x = x_ref[...].astype(jnp.float32)

    # Two-pass (mean, then centered sum-of-squares): biased variance, matches
    # F.batch_norm training-mode stats and avoids E[x^2]-mean^2 cancellation.
    mean = jnp.sum(x, axis=-1, keepdims=True) * inv_n
    centered = x - mean
    var = jnp.sum(centered * centered, axis=-1, keepdims=True) * inv_n

    inv_std = jax.lax.rsqrt(var + eps)
    scale = inv_std * w_ref[...]          # fuse on the (TILE_BC, 1) column
    o_ref[...] = (centered * scale + b_ref[...]).astype(o_ref.dtype)


def adaptive_instance_norm_2d(x, weight, bias, eps=1e-5):
    """x: (B, C, H, W). weight, bias: (B*C,). Returns (B, C, H, W) in x.dtype."""
    B, C, H, W = x.shape
    BC, HW = B * C, H * W

    x2d = x.reshape(BC, HW)                        # keep native dtype
    w2d = weight.reshape(BC, 1).astype(jnp.float32)
    b2d = bias.reshape(BC, 1).astype(jnp.float32)

    itemsize = jnp.dtype(x.dtype).itemsize
    # Sublane granularity for this dtype: 8 rows for 32-bit, 16 for bf16, 32 for int8.
    sublane = max(8, 32 // itemsize)

    # Target ~2 MiB per block: large enough to amortize per-grid-step overhead
    # (~0.35 us), small enough that 2x(in)+2x(out) double buffers fit every
    # generation's default scoped VMEM (v5e 16 MiB, v7x 32 MiB).
    target_block_bytes = 2 * 1024 * 1024
    rows = max(sublane, target_block_bytes // max(1, HW * itemsize))
    rows = (rows // sublane) * sublane             # multiple of the sublane group
    tile_bc = min(rows, pl.cdiv(BC, sublane) * sublane)

    # Pad the instance axis up to a tile multiple. Padded rows are zeros:
    # mean=0, var=0 -> finite rsqrt(eps); outputs for those rows are discarded.
    bc_pad = pl.cdiv(BC, tile_bc) * tile_bc
    if bc_pad != BC:
        x2d = jnp.pad(x2d, ((0, bc_pad - BC), (0, 0)))
        w2d = jnp.pad(w2d, ((0, bc_pad - BC), (0, 0)))
        b2d = jnp.pad(b2d, ((0, bc_pad - BC), (0, 0)))

    kernel = functools.partial(_adain_kernel, inv_n=1.0 / float(HW), eps=float(eps))

    out2d = pl.pallas_call(
        kernel,
        out_shape=jax.ShapeDtypeStruct((bc_pad, HW), x.dtype),
        grid_spec=pltpu.PrefetchScalarGridSpec(
            num_scalar_prefetch=0,
            grid=(bc_pad // tile_bc,),
            in_specs=[
                pl.BlockSpec((tile_bc, HW), lambda i: (i, 0)),
                pl.BlockSpec((tile_bc, 1), lambda i: (i, 0)),
                pl.BlockSpec((tile_bc, 1), lambda i: (i, 0)),
            ],
            out_specs=pl.BlockSpec((tile_bc, HW), lambda i: (i, 0)),
        ),
        compiler_params=pltpu.CompilerParams(
            dimension_semantics=("parallel",),   # rows are independent; v7x splits across TCs
        ),
    )(x2d, w2d, b2d)

    out2d = out2d[:BC]
    return out2d.reshape(B, C, H, W)


def _reference(x, weight, bias, eps=1e-5):
    B, C, H, W = x.shape
    xr = x.reshape(B * C, H * W).astype(jnp.float32)
    mean = xr.mean(axis=1, keepdims=True)
    var = ((xr - mean) ** 2).mean(axis=1, keepdims=True)  # biased, as in BN training
    out = (xr - mean) / jnp.sqrt(var + eps)
    out = out * weight.reshape(-1, 1).astype(jnp.float32) + bias.reshape(-1, 1).astype(jnp.float32)
    return out.reshape(B, C, H, W)


if __name__ == "__main__":
    B, C, H, W = 2, 4, 16, 16
    num_features = C

    key = jax.random.PRNGKey(0)
    kx, kw, kb = jax.random.split(key, 3)

    x = jax.random.normal(kx, (B, C, H, W), dtype=jnp.float32)
    # Module expects weight/bias of shape (B * num_features,) assigned before forward.
    weight = 1.0 + 0.1 * jax.random.normal(kw, (B * num_features,), dtype=jnp.float32)
    bias = 0.1 * jax.random.normal(kb, (B * num_features,), dtype=jnp.float32)

    out = adaptive_instance_norm_2d(x, weight, bias)
    out = jax.block_until_ready(out)

    ref = _reference(x, weight, bias)
    assert out.shape == (B, C, H, W)
    assert out.dtype == x.dtype
    assert jnp.max(jnp.abs(out.astype(jnp.float32) - ref)) < 1e-4, "mismatch vs reference"

    print("KERNEL_OK")
</pallas_src>

<mosaic_0001>
module attributes {stable_mosaic.version = 11 : i64} {
  func.func @_adain_kernel(%arg0: i32, %arg1: memref<8x256xf32, #tpu.memory_space<vmem>>, %arg2: memref<8x1xf32, #tpu.memory_space<vmem>>, %arg3: memref<8x1xf32, #tpu.memory_space<vmem>>, %arg4: memref<8x256xf32, #tpu.memory_space<vmem>>) attributes {dimension_semantics = [#tpu.dimension_semantics<parallel>], iteration_bounds = array<i64: 1>, scalar_prefetch = 0 : i64, scratch_operands = 0 : i64, tpu.core_type = #tpu.core_type<tc>, window_params = [{transform_indices = @transform_0, window_bounds = array<i64: 8, 256>}, {transform_indices = @transform_1, window_bounds = array<i64: 8, 1>}, {transform_indices = @transform_2, window_bounds = array<i64: 8, 1>}, {transform_indices = @transform_3, window_bounds = array<i64: 8, 256>}]} {
    %c0 = arith.constant 0 : index
    %c0_0 = arith.constant 0 : index
    %0 = vector.load %arg1[%c0, %c0_0] : memref<8x256xf32, #tpu.memory_space<vmem>>, vector<8x256xf32>
    %cst = arith.constant dense<0.000000e+00> : vector<8xf32>
    %1 = vector.multi_reduction <add>, %0, %cst [1] : vector<8x256xf32> to vector<8xf32>
    %2 = vector.shape_cast %1 : vector<8xf32> to vector<8x1xf32>
    %cst_1 = arith.constant 3.906250e-03 : f32
    %3 = vector.broadcast %cst_1 : f32 to vector<8x1xf32>
    %4 = arith.mulf %2, %3 : vector<8x1xf32>
    %5 = vector.broadcast %4 : vector<8x1xf32> to vector<8x256xf32>
    %6 = arith.subf %0, %5 : vector<8x256xf32>
    %7 = arith.mulf %6, %6 : vector<8x256xf32>
    %cst_2 = arith.constant dense<0.000000e+00> : vector<8xf32>
    %8 = vector.multi_reduction <add>, %7, %cst_2 [1] : vector<8x256xf32> to vector<8xf32>
    %9 = vector.shape_cast %8 : vector<8xf32> to vector<8x1xf32>
    %cst_3 = arith.constant 3.906250e-03 : f32
    %10 = vector.broadcast %cst_3 : f32 to vector<8x1xf32>
    %11 = arith.mulf %9, %10 : vector<8x1xf32>
    %cst_4 = arith.constant 9.99999974E-6 : f32
    %12 = vector.broadcast %cst_4 : f32 to vector<8x1xf32>
    %13 = arith.addf %11, %12 : vector<8x1xf32>
    %14 = math.rsqrt %13 : vector<8x1xf32>
    %c0_5 = arith.constant 0 : index
    %c0_6 = arith.constant 0 : index
    %15 = vector.load %arg2[%c0_5, %c0_6] : memref<8x1xf32, #tpu.memory_space<vmem>>, vector<8x1xf32>
    %16 = arith.mulf %14, %15 : vector<8x1xf32>
    %17 = vector.broadcast %16 : vector<8x1xf32> to vector<8x256xf32>
    %18 = arith.mulf %6, %17 : vector<8x256xf32>
    %c0_7 = arith.constant 0 : index
    %c0_8 = arith.constant 0 : index
    %19 = vector.load %arg3[%c0_7, %c0_8] : memref<8x1xf32, #tpu.memory_space<vmem>>, vector<8x1xf32>
    %20 = vector.broadcast %19 : vector<8x1xf32> to vector<8x256xf32>
    %21 = arith.addf %18, %20 : vector<8x256xf32>
    %c0_9 = arith.constant 0 : index
    %c0_10 = arith.constant 0 : index
    %22 = vector.load %arg4[%c0_9, %c0_10] : memref<8x256xf32, #tpu.memory_space<vmem>>, vector<8x256xf32>
    tpu.vector_store %arg4[%c0_9, %c0_10], %21 {strides = array<i32>} : memref<8x256xf32, #tpu.memory_space<vmem>>, vector<8x256xf32>,
    return
  }
  func.func @transform_0(%arg0: i32) -> (i32, i32) {
    %c0_i32 = arith.constant 0 : i32
    %c0_i32_0 = arith.constant 0 : i32
    return %arg0, %c0_i32 : i32, i32
  }
  func.func @transform_1(%arg0: i32) -> (i32, i32) {
    %c0_i32 = arith.constant 0 : i32
    %c0_i32_0 = arith.constant 0 : i32
    return %arg0, %c0_i32 : i32, i32
  }
  func.func @transform_2(%arg0: i32) -> (i32, i32) {
    %c0_i32 = arith.constant 0 : i32
    %c0_i32_0 = arith.constant 0 : i32
    return %arg0, %c0_i32 : i32, i32
  }
  func.func @transform_3(%arg0: i32) -> (i32, i32) {
    %c0_i32 = arith.constant 0 : i32
    %c0_i32_0 = arith.constant 0 : i32
    return %arg0, %c0_i32 : i32, i32
  }
}

</mosaic_0001>

<llo_original>
// kernel: tpu_custom_call.1
$region0: #{tpu_custom_call.1}
  #allocation0 [shape = 'u32[]', space=smem, size = 0x4, offset = 0x4, fixed_abs, tag = 'smem constant byte address 0x4 - core index']
  #allocation1 [shape = 'u32[144,128]{1,0:T(1,128)}', space=vmem, size = 0x12000, scoped, tag = 'internal scratch']
  %s0 = inlined_call_operand.vmem [shape: f32[8,256], index: 0, kind: input, shape index: {}]
  %s1 = inlined_call_operand.vmem [shape: f32[8,1], index: 1, kind: input, shape index: {}]
  %s2 = inlined_call_operand.vmem [shape: f32[8,1], index: 2, kind: input, shape index: {}]
  %s3 = inlined_call_operand.hbm [shape: f32[8,256], index: 3, kind: output, shape index: {}]
  %s4 = sld [smem:[#allocation0]]
  $region22: #{tpu_custom_call.1} parent=0
    _
  %s6 = ssub.s32 1, %s4
  %s7 = scalar_select 0, %s6, %s4
  $region1: #{tpu_custom_call.1} parent=0
    #allocation2 [shape = 'u8[8192]{0}', space=vmem, size = 0x2000, scoped, tag = 'output window, operand 0, single buffered']
    #allocation3 [shape = 's32[1]{0}', space=sflag, size = 0x4, scoped, tag = 'scoped memory for tpu_custom_call.1']
    %8 = vsyncpa [#allocation3], 0
    // Predicated region
    $region2: #{tpu_custom_call.1} parent=1 // pred_check
      _
    $region3: #{tpu_custom_call.1} parent=1 // pred_check_branch
      %10 = sbr.rel (0) target = $region5
    $region4: #{tpu_custom_call.1} parent=1 // pred_region
      _
    $region5: #{tpu_custom_call.1} parent=1 // pred_fallthru
      _
    // Predicated region
    $region6: #{tpu_custom_call.1} parent=1 // pred_check
      _
    $region7: #{tpu_custom_call.1} parent=1 // pred_check_branch
      %12 = sbr.rel (0) target = $region9
    $region8: #{tpu_custom_call.1} parent=1 // pred_region
      _
    $region9: #{tpu_custom_call.1} parent=1 // pred_fallthru
      _
    // Predicated region
    $region10: #{tpu_custom_call.1} parent=1 // pred_check
      _
    $region11: #{tpu_custom_call.1} parent=1 // pred_check_branch
      %14 = sbr.rel (0) target = $region13
    $region12: #{tpu_custom_call.1} parent=1 // pred_region
      _
    $region13: #{tpu_custom_call.1} parent=1 // pred_fallthru
      _
    %v15 = vld [vmem:[%s0] sm:$0xff]
    %v16 = vld [vmem:[%s0 + $0x8] sm:$0xff]
    %v17 = vadd.f32 %v15, %v16
    %18 = vadd.xlane.f32.xlu0 %v17
    %v19 = vpop.xlane.xlu0 %18
    %v20 = vmul.f32 %v19, 0.00390625
    %v21 = vsub.f32 %v15, %v20
    %v22 = vsub.f32 %v16, %v20
    %v23 = vmul.f32 %v21, %v21
    %v24 = vmul.f32 %v22, %v22
    %v25 = vadd.f32 %v23, %v24
    %26 = vadd.xlane.f32.xlu0 %v25
    %v27 = vpop.xlane.xlu0 %26
    %v28 = vmul.f32 %v27, 0.00390625
    %v29 = vadd.f32 %v28, 1e-05
    %v30 = vrsqrt.pop %v29
    %v31 = vld [vmem:[%s1] sm:$0xff]
    %v32 = vmul.f32 %v30, %v31
    %34 = vset.pattern.permute.xlu0 0
    %35 = vperm.xlu0 %34, %v32
    %v36 = vpop.permute.xlu0 %35
    %v38 = vmul.f32 %v21, %v36
    %v39 = vmul.f32 %v22, %v36
    %v40 = vld [vmem:[%s2] sm:$0xff]
    %42 = vset.pattern.permute.xlu0 0
    %43 = vperm.xlu0 %42, %v40
    %v44 = vpop.permute.xlu0 %43
    %v46 = vadd.f32 %v38, %v44
    %v47 = vadd.f32 %v39, %v44
    %48 = vst [vmem:[#allocation2] sm:$0xff] %v46
    %49 = vst [vmem:[#allocation2 + $0x8] sm:$0xff] %v47
    // Predicated region
    $region14: #{tpu_custom_call.1} parent=1 // pred_check
      _
    $region15: #{tpu_custom_call.1} parent=1 // pred_check_branch
      %51 = sbr.rel (0) target = $region17
    $region16: #{tpu_custom_call.1} parent=1 // pred_region
      %s53 = ssub.s32 256, 256
      %54 = vsyncadd [#allocation3], %s53
      %s56 = sshll.u32 [#allocation2], 4
      %s57 = int_to_ptr.vmem [resolvable:$true] %s56
      %59 = dma.vmem_to_hbm [thread:$0]  %s57, 256, %s3, [#allocation3]
    $region17: #{tpu_custom_call.1} parent=1 // pred_fallthru
      _
    // Predicated region
    $region18: #{tpu_custom_call.1} parent=1 // pred_check
      _
    $region19: #{tpu_custom_call.1} parent=1 // pred_check_branch
      %61 = sbr.rel (0) target = $region21
    $region20: #{tpu_custom_call.1} parent=1 // pred_region
      %62 = dma.done [#allocation3], 256
    $region21: #{tpu_custom_call.1} parent=1 // pred_fallthru
      _
    %63 = vsyncpa [#allocation3], 1

</llo_original>
